<compile_context>
chip_gen: v7x
topology: tpu7x:2x2x1
jax: 0.10.0
libtpu: 0.0.40
codegen_flags: <defaults>
</compile_context>

<pallas_src>
import functools

import jax
import jax.numpy as jnp
from jax.experimental import pallas as pl
from jax.experimental.pallas import tpu as pltpu


def _round_up(x, m):
    return (x + m - 1) // m * m


def _pick_nb(n, h):
    """Images per grid step: largest divisor of n with nb*h <= 128 rows (keeps
    the f32 accumulator + matmul temporaries comfortably inside the 64 vregs),
    while leaving grid length >= 2 so both v7x TensorCores get work."""
    max_nb = max(1, 128 // max(h, 1))
    best = 1
    for nb in range(1, min(n, max_nb) + 1):
        if n % nb:
            continue
        if n >= 2 and n // nb < 2:
            continue
        best = nb
    return best


# ---------------------------------------------------------------------------
# Kernel: one grid step processes Nb halo-padded images as row-band matmuls.
# ---------------------------------------------------------------------------
def _conv_rowband_kernel(x_ref, b_ref, o_ref, *, apply_relu):
    """x_ref: (Nb, H+2, K)   bf16  halo-padded, row-flattened images
                                   (lane W*Cin holds a constant 1 on real rows)
       b_ref: (3, K, Lout)   bf16  band matrices per dy tap (BN scale + bias folded)
       o_ref: (Nb, H, Lout)  f32   lane-dense output rows (Lout % 128 == 0)
    """
    nb, H, L_out = o_ref.shape
    K = x_ref.shape[-1]

    def tap(dy):
        lhs = x_ref[:, dy:dy + H, :].reshape(nb * H, K)     # M = Nb*H for the MXU
        return jnp.dot(lhs, b_ref[dy], preferred_element_type=jnp.float32)

    acc = tap(0)
    acc = acc + tap(1)
    acc = acc + tap(2)
    if apply_relu:
        acc = jnp.maximum(acc, 0.0)
    o_ref[...] = acc.reshape(nb, H, L_out).astype(o_ref.dtype)


# ---------------------------------------------------------------------------
# Band weights (built once per (weights, spatial-W), outside the hot path).
# ---------------------------------------------------------------------------
def _build_band_weights(w_eff_hwio, shift, w):
    """(3, K, Lout) bf16 band matrices with
         B[dy, x_in*Cin + ci, x_out*Cout + co] = w_eff[dy, dx, ci, co],
         x_in = x_out + dx - 1  (SAME padding along W needs no data movement);
       bias / folded-BN shift sits in row W*Cin of the dy=1 tap (driven by the
       constant-1 lane of x).  K and Lout are rounded up to 128."""
    _, _, cin, cout = w_eff_hwio.shape
    l_x, l_used = w * cin, w * cout
    k = _round_up(l_x + 1, 128)
    l_out = _round_up(l_used, 128)
    core = jnp.zeros((3, w, cin, w, cout), jnp.float32)
    for dx in range(3):
        sel = jnp.eye(w, w, k=1 - dx, dtype=jnp.float32)          # [x_in, x_out]
        core = core + jnp.einsum("ab,dio->daibo", sel, w_eff_hwio[:, dx])
    band = jnp.zeros((3, k, l_out), jnp.float32)
    band = band.at[:, :l_x, :l_used].set(core.reshape(3, l_x, l_used))
    band = band.at[1, l_x, :l_used].set(jnp.tile(shift, w))        # bias via ones-lane
    return band.astype(jnp.bfloat16)


# ---------------------------------------------------------------------------
# Forward in row layout: (N, H, W*Cin) -> (N, H, W*Cout)
# ---------------------------------------------------------------------------
def _conv_rows_pallas(x_rows, b_band, *, cin, cout, apply_relu, out_dtype):
    n, h, l_x = x_rows.shape
    w = l_x // cin
    _, k, l_out = b_band.shape
    nb = _pick_nb(n, h)

    # H-halo pad (1 row top/bottom), lane pad to K, constant-1 bias lane, bf16 cast
    # -- one small fused relayout pass.
    xp = jnp.zeros((n, h + 2, k), jnp.bfloat16)
    xp = xp.at[:, 1:h + 1, :l_x].set(x_rows.astype(jnp.bfloat16))
    xp = xp.at[:, 1:h + 1, l_x].set(1.0)

    out_rows = pl.pallas_call(
        functools.partial(_conv_rowband_kernel, apply_relu=apply_relu),
        out_shape=jax.ShapeDtypeStruct((n, h, l_out), out_dtype),
        grid_spec=pltpu.PrefetchScalarGridSpec(
            num_scalar_prefetch=0,
            grid=(n // nb,),
            in_specs=[
                pl.BlockSpec((nb, h + 2, k), lambda i: (i, 0, 0)),
                pl.BlockSpec((3, k, l_out), lambda i: (0, 0, 0)),   # resident weights
            ],
            out_specs=pl.BlockSpec((nb, h, l_out), lambda i: (i, 0, 0)),
        ),
        compiler_params=pltpu.CompilerParams(
            dimension_semantics=("parallel",)),
    )(xp, b_band)

    return out_rows[:, :, :w * cout]


# ---------------------------------------------------------------------------
# Module wrapper (eval mode).  Prepares weights once, returns jitted apply fns.
# ---------------------------------------------------------------------------
def make_conv_block(weight_oihw, bias, *, is_batchnorm=False, bn_params=None,
                    is_relu_activ=True, is_dropout=False, eps=1e-5):
    # TODO(synk): training-mode Dropout2d not implemented (eval mode == identity).
    del is_dropout
    weight_oihw = jnp.asarray(weight_oihw, jnp.float32)
    bias = jnp.asarray(bias, jnp.float32)
    cout, cin = int(weight_oihw.shape[0]), int(weight_oihw.shape[1])
    w_hwio = jnp.transpose(weight_oihw, (2, 3, 1, 0))              # (3,3,Cin,Cout)
    if is_batchnorm:
        g = jnp.asarray(bn_params["gamma"], jnp.float32)
        b = jnp.asarray(bn_params["beta"], jnp.float32)
        mu = jnp.asarray(bn_params["running_mean"], jnp.float32)
        var = jnp.asarray(bn_params["running_var"], jnp.float32)
        scale = g * jax.lax.rsqrt(var + eps)
        shift = (bias - mu) * scale + b
        w_eff = w_hwio * scale[None, None, None, :]                # conv(x, s*w) == s*conv(x, w)
    else:
        w_eff, shift = w_hwio, bias

    band_cache = {}                                                # per spatial width W

    def _band(w):
        if w not in band_cache:
            band_cache[w] = _build_band_weights(w_eff, shift, w)
        return band_cache[w]

    @jax.jit
    def _rows_jit(x_rows, band):
        return _conv_rows_pallas(x_rows, band, cin=cin, cout=cout,
                                 apply_relu=is_relu_activ, out_dtype=x_rows.dtype)

    @jax.jit
    def _nchw_jit(x_nchw, band):
        n, _, h, w = x_nchw.shape
        x_rows = jnp.transpose(x_nchw, (0, 2, 3, 1)).reshape(n, h, w * cin)
        y_rows = _conv_rows_pallas(x_rows, band, cin=cin, cout=cout,
                                   apply_relu=is_relu_activ, out_dtype=x_nchw.dtype)
        return jnp.transpose(y_rows.reshape(n, h, w, cout), (0, 3, 1, 2))

    def apply_nchw(x_nchw):
        """ConvBlock.forward on an NCHW input."""
        return _nchw_jit(x_nchw, _band(int(x_nchw.shape[3])))

    def apply_rows(x_rows):
        """(N, H, W*Cin) -> (N, H, W*Cout); use between stacked ConvBlocks to
        skip the NCHW<->rows relayouts."""
        return _rows_jit(x_rows, _band(int(x_rows.shape[2]) // cin))

    apply_nchw.rows = apply_rows
    return apply_nchw


# ---------------------------------------------------------------------------
# Pure-JAX reference
# ---------------------------------------------------------------------------
def _reference_conv_block(x, weight, bias, *, is_batchnorm=False, bn_params=None,
                          is_relu_activ=True, eps=1e-5):
    y = jax.lax.conv_general_dilated(
        x, weight, window_strides=(1, 1), padding="SAME",
        dimension_numbers=("NCHW", "OIHW", "NCHW"))
    y = y + bias.reshape(1, -1, 1, 1)
    if is_batchnorm:
        g = bn_params["gamma"].reshape(1, -1, 1, 1)
        b = bn_params["beta"].reshape(1, -1, 1, 1)
        mu = bn_params["running_mean"].reshape(1, -1, 1, 1)
        var = bn_params["running_var"].reshape(1, -1, 1, 1)
        y = (y - mu) / jnp.sqrt(var + eps) * g + b
    if is_relu_activ:
        y = jnp.maximum(y, 0.0)
    return y


if __name__ == "__main__":
    # ConvBlock(n_feat_in=4, n_feat_out=8), spatial 16x16, batch 2.
    N, C_IN, C_OUT, H, W = 2, 4, 8, 16, 16

    key = jax.random.PRNGKey(0)
    kx, kw, kb, kg, kbt, km, kv, kx8 = jax.random.split(key, 8)

    x = jax.random.normal(kx, (N, C_IN, H, W), dtype=jnp.float32)
    fan_in = C_IN * 3 * 3
    bound = 1.0 / (fan_in ** 0.5)
    weight = jax.random.uniform(kw, (C_OUT, C_IN, 3, 3),
                                minval=-bound, maxval=bound, dtype=jnp.float32)
    bias = jax.random.uniform(kb, (C_OUT,), minval=-bound, maxval=bound,
                              dtype=jnp.float32)

    # Default flags: conv + bias + ReLU.  (N=2 -> Nb=1, grid=2: both v7x TCs busy.)
    block = make_conv_block(weight, bias, is_relu_activ=True)
    out = jax.block_until_ready(block(x))
    ref = _reference_conv_block(x, weight, bias, is_relu_activ=True)
    assert out.shape == (N, C_OUT, H, W)
    assert jnp.allclose(out, ref, atol=5e-2, rtol=5e-2), (
        "conv+relu mismatch, max err %e" % float(jnp.max(jnp.abs(out - ref))))

    # Eval-mode BatchNorm (running stats) folded into the band weights.
    bn = dict(
        gamma=jax.random.uniform(kg, (C_OUT,), minval=0.5, maxval=1.5, dtype=jnp.float32),
        beta=0.1 * jax.random.normal(kbt, (C_OUT,), dtype=jnp.float32),
        running_mean=0.1 * jax.random.normal(km, (C_OUT,), dtype=jnp.float32),
        running_var=jax.random.uniform(kv, (C_OUT,), minval=0.5, maxval=1.5, dtype=jnp.float32),
    )
    block_bn = make_conv_block(weight, bias, is_batchnorm=True, bn_params=bn,
                               is_relu_activ=True)
    out_bn = jax.block_until_ready(block_bn(x))
    ref_bn = _reference_conv_block(x, weight, bias, is_batchnorm=True,
                                   bn_params=bn, is_relu_activ=True)
    assert jnp.allclose(out_bn, ref_bn, atol=5e-2, rtol=5e-2), (
        "conv+bn+relu mismatch, max err %e" % float(jnp.max(jnp.abs(out_bn - ref_bn))))

    # Larger batch exercises the Nb>1 (M = Nb*H) path: N=8 -> Nb=4, grid=2.
    x8 = jax.random.normal(kx8, (8, C_IN, H, W), dtype=jnp.float32)
    out8 = jax.block_until_ready(block(x8))
    ref8 = _reference_conv_block(x8, weight, bias, is_relu_activ=True)
    assert out8.shape == (8, C_OUT, H, W)
    assert jnp.allclose(out8, ref8, atol=5e-2, rtol=5e-2), (
        "batched conv+relu mismatch, max err %e" % float(jnp.max(jnp.abs(out8 - ref8))))

    print("KERNEL_OK")
</pallas_src>

<mosaic_0001>
module attributes {stable_mosaic.version = 11 : i64} {
  func.func @_conv_rowband_kernel(%arg0: i32, %arg1: memref<1x18x128xbf16, #tpu.memory_space<vmem>>, %arg2: memref<3x128x128xbf16, #tpu.memory_space<vmem>>, %arg3: memref<1x16x128xf32, #tpu.memory_space<vmem>>) attributes {dimension_semantics = [#tpu.dimension_semantics<parallel>], iteration_bounds = array<i64: 2>, scalar_prefetch = 0 : i64, scratch_operands = 0 : i64, tpu.core_type = #tpu.core_type<tc>, window_params = [{transform_indices = @transform_0, window_bounds = array<i64: 1, 18, 128>}, {pipeline_mode = #tpu.pipeline_mode<synchronous>, transform_indices = @transform_1, window_bounds = array<i64: 3, 128, 128>}, {transform_indices = @transform_2, window_bounds = array<i64: 1, 16, 128>}]} {
    %c0 = arith.constant 0 : index
    %c0_0 = arith.constant 0 : index
    %c0_1 = arith.constant 0 : index
    %0 = vector.load %arg1[%c0, %c0_0, %c0_1] : memref<1x18x128xbf16, #tpu.memory_space<vmem>>, vector<1x16x128xbf16>
    %1 = vector.shape_cast %0 : vector<1x16x128xbf16> to vector<16x128xbf16>
    %c0_2 = arith.constant 0 : index
    %c0_3 = arith.constant 0 : index
    %c0_4 = arith.constant 0 : index
    %2 = vector.load %arg2[%c0_2, %c0_3, %c0_4] : memref<3x128x128xbf16, #tpu.memory_space<vmem>>, vector<1x128x128xbf16>
    %3 = vector.shape_cast %2 : vector<1x128x128xbf16> to vector<128x128xbf16>
    %cst = arith.constant dense<0.000000e+00> : vector<16x128xf32>
    %4 = tpu.matmul %1, %3, %cst {dimension_numbers = #tpu.dot_dimension_numbers<[1], [0], [0], [1], [0, 0, 1, 1], [], []>} : vector<16x128xbf16>, vector<128x128xbf16>, vector<16x128xf32> -> vector<16x128xf32>
    %c0_5 = arith.constant 0 : index
    %c1 = arith.constant 1 : index
    %c0_6 = arith.constant 0 : index
    %5 = vector.load %arg1[%c0_5, %c1, %c0_6] : memref<1x18x128xbf16, #tpu.memory_space<vmem>>, vector<1x16x128xbf16>
    %6 = vector.shape_cast %5 : vector<1x16x128xbf16> to vector<16x128xbf16>
    %c1_7 = arith.constant 1 : index
    %c0_8 = arith.constant 0 : index
    %c0_9 = arith.constant 0 : index
    %7 = vector.load %arg2[%c1_7, %c0_8, %c0_9] : memref<3x128x128xbf16, #tpu.memory_space<vmem>>, vector<1x128x128xbf16>
    %8 = vector.shape_cast %7 : vector<1x128x128xbf16> to vector<128x128xbf16>
    %cst_10 = arith.constant dense<0.000000e+00> : vector<16x128xf32>
    %9 = tpu.matmul %6, %8, %cst_10 {dimension_numbers = #tpu.dot_dimension_numbers<[1], [0], [0], [1], [0, 0, 1, 1], [], []>} : vector<16x128xbf16>, vector<128x128xbf16>, vector<16x128xf32> -> vector<16x128xf32>
    %10 = arith.addf %4, %9 : vector<16x128xf32>
    %c0_11 = arith.constant 0 : index
    %c2 = arith.constant 2 : index
    %c0_12 = arith.constant 0 : index
    %11 = vector.load %arg1[%c0_11, %c2, %c0_12] : memref<1x18x128xbf16, #tpu.memory_space<vmem>>, vector<1x16x128xbf16>
    %12 = vector.shape_cast %11 : vector<1x16x128xbf16> to vector<16x128xbf16>
    %c2_13 = arith.constant 2 : index
    %c0_14 = arith.constant 0 : index
    %c0_15 = arith.constant 0 : index
    %13 = vector.load %arg2[%c2_13, %c0_14, %c0_15] : memref<3x128x128xbf16, #tpu.memory_space<vmem>>, vector<1x128x128xbf16>
    %14 = vector.shape_cast %13 : vector<1x128x128xbf16> to vector<128x128xbf16>
    %cst_16 = arith.constant dense<0.000000e+00> : vector<16x128xf32>
    %15 = tpu.matmul %12, %14, %cst_16 {dimension_numbers = #tpu.dot_dimension_numbers<[1], [0], [0], [1], [0, 0, 1, 1], [], []>} : vector<16x128xbf16>, vector<128x128xbf16>, vector<16x128xf32> -> vector<16x128xf32>
    %16 = arith.addf %10, %15 : vector<16x128xf32>
    %cst_17 = arith.constant 0.000000e+00 : f32
    %17 = vector.broadcast %cst_17 : f32 to vector<16x128xf32>
    %18 = arith.maximumf %16, %17 : vector<16x128xf32>
    %19 = vector.shape_cast %18 : vector<16x128xf32> to vector<1x16x128xf32>
    %c0_18 = arith.constant 0 : index
    %c0_19 = arith.constant 0 : index
    %c0_20 = arith.constant 0 : index
    %20 = vector.load %arg3[%c0_18, %c0_19, %c0_20] : memref<1x16x128xf32, #tpu.memory_space<vmem>>, vector<1x16x128xf32>
    tpu.vector_store %arg3[%c0_18, %c0_19, %c0_20], %19 {strides = array<i32>} : memref<1x16x128xf32, #tpu.memory_space<vmem>>, vector<1x16x128xf32>,
    return
  }
  func.func @transform_0(%arg0: i32) -> (i32, i32, i32) {
    %c0_i32 = arith.constant 0 : i32
    %c0_i32_0 = arith.constant 0 : i32
    %c0_i32_1 = arith.constant 0 : i32
    return %arg0, %c0_i32, %c0_i32_0 : i32, i32, i32
  }
  func.func @transform_1(%arg0: i32) -> (i32, i32, i32) {
    %c0_i32 = arith.constant 0 : i32
    %c0_i32_0 = arith.constant 0 : i32
    %c0_i32_1 = arith.constant 0 : i32
    %c0_i32_2 = arith.constant 0 : i32
    return %c0_i32, %c0_i32_0, %c0_i32_1 : i32, i32, i32
  }
  func.func @transform_2(%arg0: i32) -> (i32, i32, i32) {
    %c0_i32 = arith.constant 0 : i32
    %c0_i32_0 = arith.constant 0 : i32
    %c0_i32_1 = arith.constant 0 : i32
    return %arg0, %c0_i32, %c0_i32_0 : i32, i32, i32
  }
}

</mosaic_0001>

<llo_original>
// kernel: _nchw_jit.1
$region0: #{_nchw_jit.1}
  #allocation0 [shape = 'u32[]', space=smem, size = 0x4, offset = 0x4, fixed_abs, tag = 'smem constant byte address 0x4 - core index']
  #allocation1 [shape = 'u32[144,128]{1,0:T(1,128)}', space=vmem, size = 0x12000, scoped, tag = 'internal scratch']
  %s0 = inlined_call_operand.vmem [shape: bf16[2,18,128], index: 0, kind: input, shape index: {}]
  %s1 = inlined_call_operand.vmem [shape: bf16[3,128,128], index: 1, kind: input, shape index: {}]
  %s2 = inlined_call_operand.vmem [shape: f32[2,16,128], index: 2, kind: output, shape index: {}]
  %s3 = sld [smem:[#allocation0]]
  $region41: #{_nchw_jit.1} parent=0
    _
  %s5 = ssub.s32 1, %s3
  %s6 = scalar_select 0, %s5, %s3
  loop: start=0, step=1, limit=4
  $region2: #{_nchw_jit.1} parent=0 // loop_pre_header
    _
  $region3: #{_nchw_jit.1} parent=0 // loop_header
    %s8 = sphi 0, %s12
    %p9 = scmp.ge.s32.totalorder %s8, 4
    %s18 = sphi 0, %s20
    %s21 = sphi 0, %s18
    %s22 = sphi 0, %s21
    %s38 = sphi 0, %s22
    %s42 = sphi 0, %s42
    %s44 = sphi 0, %s42
    %s45 = sphi 0, %s44
    %s59 = sphi 0, %s45
    %s65 = sphi 0, %s67
    %s68 = sphi 0, %s65
    %s69 = sphi 0, %s68
    %s85 = sphi 0, %s69
  $region4: #{_nchw_jit.1} parent=0 // loop_header_branch
    %11 = sbr.rel (%p9) target = $region8
  $region5: #{_nchw_jit.1} parent=0 // loop_body
    %s13 = ssub.s32 %s8, 1
    %s14 = ssub.s32 %s8, 2
    %s15 = sadd.s32 %s8, 1
    %s16 = ssub.s32 %s8, %s15
    %p17 = scmp.eq.s32.totalorder %s16, 0
    %s19 = sadd.s32 %s18, 1
    %s20 = scalar_select %p17, %s18, %s19
    %p23 = pneg %p17
    %p24 = scmp.eq.s32.totalorder %s8, 1
    %p25 = por %p23, %p24
    %p26 = scmp.ne.s32.totalorder %s18, %s21
    %p27 = scmp.eq.s32.totalorder %s8, 0
    %p28 = por %p26, %p27
    %p29 = scmp.ne.s32.totalorder %s18, %s21
    %p30 = scmp.eq.s32.totalorder %s13, 1
    %p31 = por %p29, %p30
    %p32 = scmp.ne.s32.totalorder %s21, %s22
    %p33 = scmp.eq.s32.totalorder %s13, 0
    %p34 = por %p32, %p33
    %p35 = scmp.ne.s32.totalorder %s21, %s22
    %p36 = scmp.eq.s32.totalorder %s14, 1
    %p37 = por %p35, %p36
    %p39 = scmp.ne.s32.totalorder %s22, %s38
    %p40 = scmp.eq.s32.totalorder %s14, 0
    %p41 = por %p39, %p40
    %s43 = sadd.s32 %s42, 1
    %p46 = scmp.eq.s32.totalorder %s8, 1
    %p47 = scmp.ne.s32.totalorder %s42, %s44
    %p48 = scmp.eq.s32.totalorder %s8, 0
    %p49 = por %p47, %p48
    %p50 = scmp.ne.s32.totalorder %s42, %s44
    %p51 = scmp.eq.s32.totalorder %s13, 1
    %p52 = por %p50, %p51
    %p53 = scmp.ne.s32.totalorder %s44, %s45
    %p54 = scmp.eq.s32.totalorder %s13, 0
    %p55 = por %p53, %p54
    %p56 = scmp.ne.s32.totalorder %s44, %s45
    %p57 = scmp.eq.s32.totalorder %s14, 1
    %p58 = por %p56, %p57
    %p60 = scmp.ne.s32.totalorder %s45, %s59
    %p61 = scmp.eq.s32.totalorder %s14, 0
    %p62 = por %p60, %p61
    %s63 = ssub.s32 %s8, %s15
    %p64 = scmp.eq.s32.totalorder %s63, 0
    %s66 = sadd.s32 %s65, 1
    %s67 = scalar_select %p64, %s65, %s66
    %p70 = pneg %p64
    %p71 = scmp.eq.s32.totalorder %s8, 1
    %p72 = por %p70, %p71
    %p73 = scmp.ne.s32.totalorder %s65, %s68
    %p74 = scmp.eq.s32.totalorder %s8, 0
    %p75 = por %p73, %p74
    %p76 = scmp.ne.s32.totalorder %s65, %s68
    %p77 = scmp.eq.s32.totalorder %s13, 1
    %p78 = por %p76, %p77
    %p79 = scmp.ne.s32.totalorder %s68, %s69
    %p80 = scmp.eq.s32.totalorder %s13, 0
    %p81 = por %p79, %p80
    %p82 = scmp.ne.s32.totalorder %s68, %s69
    %p83 = scmp.eq.s32.totalorder %s14, 1
    %p84 = por %p82, %p83
    %p86 = scmp.ne.s32.totalorder %s69, %s85
    %p87 = scmp.eq.s32.totalorder %s14, 0
    %p88 = por %p86, %p87
    %p89 = scmp.le.s32.totalorder 1, %s8
    %p90 = scmp.lt.s32.totalorder %s8, 3
    %p91 = pnand %p89, %p90
    %p92 = pneg %p91
    // Predicated region
    $region9: #{_nchw_jit.1} parent=5 // pred_check
      _
    $region10: #{_nchw_jit.1} parent=5 // pred_check_branch
      %94 = sbr.rel (%p91) target = $region12
    $region11: #{_nchw_jit.1} parent=5 // pred_region
      %s95 = ssub.s32 %s8, 1
      // Predicated region
      $region13: #{_nchw_jit.1} parent=11 // pred_check
        %p96 = pneg %p55
      $region14: #{_nchw_jit.1} parent=11 // pred_check_branch
        %98 = sbr.rel (%p96) target = $region16
      $region15: #{_nchw_jit.1} parent=11 // pred_region
        _
      $region16: #{_nchw_jit.1} parent=11 // pred_fallthru
        _
    $region12: #{_nchw_jit.1} parent=5 // pred_fallthru
      _
    %p99 = scmp.lt.s32.totalorder %s8, 2
    // Predicated region
    $region17: #{_nchw_jit.1} parent=5 // pred_check
      %p100 = pneg %p99
    $region18: #{_nchw_jit.1} parent=5 // pred_check_branch
      %102 = sbr.rel (%p100) target = $region20
    $region19: #{_nchw_jit.1} parent=5 // pred_region
      // Predicated region
      $region21: #{_nchw_jit.1} parent=19 // pred_check
        %p103 = pneg %p28
      $region22: #{_nchw_jit.1} parent=19 // pred_check_branch
        %105 = sbr.rel (%p103) target = $region24
      $region23: #{_nchw_jit.1} parent=19 // pred_region
        %p106 = scmp.lt.s32.totalorder %s8, 1
        %s107 = scalar_select %p106, %s8, 1
        %s108 = smul.addr %s107, 3
        %s109 = smul.addr %s108, 4
        %s110 = scalar_lea.vmem %s0, %s109
      $region24: #{_nchw_jit.1} parent=19 // pred_fallthru
        _
    $region20: #{_nchw_jit.1} parent=5 // pred_fallthru
      _
    %p111 = scmp.le.s32.totalorder 1, %s8
    %p112 = scmp.lt.s32.totalorder %s8, 3
    %p113 = pnand %p111, %p112
    %p114 = pneg %p113
    // Predicated region
    $region25: #{_nchw_jit.1} parent=5 // pred_check
      _
    $region26: #{_nchw_jit.1} parent=5 // pred_check_branch
      %116 = sbr.rel (%p113) target = $region28
    $region27: #{_nchw_jit.1} parent=5 // pred_region
      %s117 = ssub.s32 %s8, 1
      %p118 = scmp.lt.s32.totalorder %s13, 1
      %s119 = scalar_select %p118, %s13, 1
      %s120 = smul.addr %s119, 3
      %s121 = smul.addr %s120, 4
      %s122 = scalar_lea.vmem %s0, %s121
      %p123 = pneg %p34
      %p124 = pneg %p31
      %p125 = pneg %p55
      %p126 = pneg %p52
      %p127 = pneg %p81
      %p128 = pneg %p78
      %p129 = scmp.lt.s32.totalorder %s13, 1
      %s130 = scalar_select %p129, %s13, 1
      %s131 = smul.addr %s130, 2
      %s132 = smul.addr %s131, 8
      %s133 = scalar_lea.vmem %s2, %s132
      %p134 = scmp.lt.s32.totalorder %s13, 1
      %s135 = scalar_select %p134, %s13, 1
      %s136 = smul.addr %s135, 3
      %s137 = smul.addr %s136, 4
      %s138 = scalar_lea.vmem %s0, %s137
      %p139 = scmp.lt.s32.totalorder %s13, 1
      %s140 = scalar_select %p139, %s13, 1
      %s141 = smul.addr %s140, 2
      %s142 = smul.addr %s141, 8
      %s143 = scalar_lea.vmem %s2, %s142
      %v145 = vld [vmem:[%s138] sm:$0xf]
      %v146 = vld [vmem:[%s138 + $0x4] sm:$0xf]
      %v147 = vld [vmem:[%s1] sm:$0xf]
      %v148 = vld [vmem:[%s1 + $0x4] sm:$0xf]
      %v149 = vld [vmem:[%s1 + $0x8] sm:$0xf]
      %v150 = vld [vmem:[%s1 + $0xc] sm:$0xf]
      %v151 = vld [vmem:[%s1 + $0x10] sm:$0xf]
      %v152 = vld [vmem:[%s1 + $0x14] sm:$0xf]
      %v153 = vld [vmem:[%s1 + $0x18] sm:$0xf]
      %v154 = vld [vmem:[%s1 + $0x1c] sm:$0xf]
      %v155 = vld [vmem:[%s1 + $0x20] sm:$0xf]
      %v156 = vld [vmem:[%s1 + $0x24] sm:$0xf]
      %v157 = vld [vmem:[%s1 + $0x28] sm:$0xf]
      %v158 = vld [vmem:[%s1 + $0x2c] sm:$0xf]
      %v159 = vld [vmem:[%s1 + $0x30] sm:$0xf]
      %v160 = vld [vmem:[%s1 + $0x34] sm:$0xf]
      %v161 = vld [vmem:[%s1 + $0x38] sm:$0xf]
      %v162 = vld [vmem:[%s1 + $0x3c] sm:$0xf]
      %v163 = vld [vmem:[%s138 + $0x8] sm:$0x1]
      %s164 = scalar_lea.vmem %s1, 64
      %v165 = vld [vmem:[%s164] sm:$0xf]
      %v166 = vld [vmem:[%s164 + $0x4] sm:$0xf]
      %v167 = vld [vmem:[%s164 + $0x8] sm:$0xf]
      %v168 = vld [vmem:[%s164 + $0xc] sm:$0xf]
      %v169 = vld [vmem:[%s164 + $0x10] sm:$0xf]
      %v170 = vld [vmem:[%s164 + $0x14] sm:$0xf]
      %v171 = vld [vmem:[%s164 + $0x18] sm:$0xf]
      %v172 = vld [vmem:[%s164 + $0x1c] sm:$0xf]
      %v173 = vld [vmem:[%s164 + $0x20] sm:$0xf]
      %v174 = vld [vmem:[%s164 + $0x24] sm:$0xf]
      %v175 = vld [vmem:[%s164 + $0x28] sm:$0xf]
      %v176 = vld [vmem:[%s164 + $0x2c] sm:$0xf]
      %v177 = vld [vmem:[%s164 + $0x30] sm:$0xf]
      %v178 = vld [vmem:[%s164 + $0x34] sm:$0xf]
      %v179 = vld [vmem:[%s164 + $0x38] sm:$0xf]
      %v180 = vld [vmem:[%s164 + $0x3c] sm:$0xf]
      %v184 = vunpack.c.l.b16 %v145
      %v185 = vunpack.c.l.b16 %v146
      %v186 = vunpack.c.l.b16 %v163
      %v187 = vpack.c.b16 %v185, %v184
      %v188 = vpack.c.b16 %v186, %v186
      %vm189 = vsmask.f32 7424
      %v191 = vshrl.u32 %v187, 16
      %v193 = vshll.u32 %v187, 16
      %v195 = vrot.slane %v193, 1
      %v196 = vor.u32 %v191, %v195
      %v198 = vshll.u32 %v188, 16
      %v200 = vrot.slane %v198, 1
      %v201 = vsel %vm189, %v196, %v200
      %v219 = vunpack.c.l.b16 %v165
      %v220 = vunpack.c.l.b16 %v166
      %v221 = vunpack.c.l.b16 %v167
      %v222 = vunpack.c.l.b16 %v168
      %v223 = vunpack.c.l.b16 %v169
      %v224 = vunpack.c.l.b16 %v170
      %v225 = vunpack.c.l.b16 %v171
      %v226 = vunpack.c.l.b16 %v172
      %v227 = vunpack.c.l.b16 %v173
      %v228 = vunpack.c.l.b16 %v174
      %v229 = vunpack.c.l.b16 %v175
      %v230 = vunpack.c.l.b16 %v176
      %v231 = vunpack.c.l.b16 %v177
      %v232 = vunpack.c.l.b16 %v178
      %v233 = vunpack.c.l.b16 %v179
      %v234 = vunpack.c.l.b16 %v180
      %v235 = vpack.c.b16 %v220, %v219
      %v236 = vpack.c.b16 %v222, %v221
      %v237 = vpack.c.b16 %v224, %v223
      %v238 = vpack.c.b16 %v226, %v225
      %v239 = vpack.c.b16 %v228, %v227
      %v240 = vpack.c.b16 %v230, %v229
      %v241 = vpack.c.b16 %v232, %v231
      %v242 = vpack.c.b16 %v234, %v233
      %251 = vmatprep.subr.bf16.mxu0 0
      %252 = vmatpush1.bf16.msra.mxu0 %v235
      %253 = vmatprep.subr.bf16.mxu0 0
      %254 = vmatpush1.bf16.msra.mxu0 %v236
      %255 = vmatprep.subr.bf16.mxu0 0
      %256 = vmatpush1.bf16.msra.mxu0 %v237
      %257 = vmatprep.subr.bf16.mxu0 0
      %258 = vmatpush1.bf16.msra.mxu0 %v238
      %259 = vmatprep.subr.bf16.mxu0 0
      %260 = vmatpush1.bf16.msra.mxu0 %v239
      %261 = vmatprep.subr.bf16.mxu0 0
      %262 = vmatpush1.bf16.msra.mxu0 %v240
      %263 = vmatprep.subr.bf16.mxu0 0
      %264 = vmatpush1.bf16.msra.mxu0 %v241
      %265 = vmatprep.subr.bf16.mxu0 0
      %266 = vmatpush1.bf16.msra.mxu0 %v242
      %267 = vmatprep.subr.bf16.mxu0 0
      %268 = vmatpush1.bf16.msra.mxu0 0
      %269 = vmatprep.subr.bf16.mxu0 0
      %270 = vmatpush1.bf16.msra.mxu0 0
      %271 = vmatprep.subr.bf16.mxu0 0
      %272 = vmatpush1.bf16.msra.mxu0 0
      %273 = vmatprep.subr.bf16.mxu0 0
      %274 = vmatpush1.bf16.msra.mxu0 0
      %275 = vmatprep.subr.bf16.mxu0 0
      %276 = vmatpush1.bf16.msra.mxu0 0
      %277 = vmatprep.subr.bf16.mxu0 0
      %278 = vmatpush1.bf16.msra.mxu0 0
      %279 = vmatprep.subr.bf16.mxu0 0
      %280 = vmatpush1.bf16.msra.mxu0 0
      %281 = vmatprep.subr.bf16.mxu0 0
      %282 = vmatpush1.bf16.msra.mxu0 0
      %283 = vmatprep.mubr.bf16.mxu0 0
      %284 = vmatmul.mubr.bf16.gmra.mrb[0].mxu0 %v201
      %v285 = vpop.f32.mrb[0].mxu0
      %v286 = vadd.f32 0.0, %v285
      %v287 = vpop.f32.mrb[0].mxu0
      %v288 = vpop.f32.mrb[0].mxu0
      %v289 = vadd.f32 0.0, %v288
      %v290 = vpop.f32.mrb[0].mxu0
      %291 = vdwg.mxu0
      %v309 = vunpack.c.l.b16 %v147
      %v310 = vunpack.c.l.b16 %v148
      %v311 = vunpack.c.l.b16 %v149
      %v312 = vunpack.c.l.b16 %v150
      %v313 = vunpack.c.l.b16 %v151
      %v314 = vunpack.c.l.b16 %v152
      %v315 = vunpack.c.l.b16 %v153
      %v316 = vunpack.c.l.b16 %v154
      %v317 = vunpack.c.l.b16 %v155
      %v318 = vunpack.c.l.b16 %v156
      %v319 = vunpack.c.l.b16 %v157
      %v320 = vunpack.c.l.b16 %v158
      %v321 = vunpack.c.l.b16 %v159
      %v322 = vunpack.c.l.b16 %v160
      %v323 = vunpack.c.l.b16 %v161
      %v324 = vunpack.c.l.b16 %v162
      %v325 = vpack.c.b16 %v310, %v309
      %v326 = vpack.c.b16 %v312, %v311
      %v327 = vpack.c.b16 %v314, %v313
      %v328 = vpack.c.b16 %v316, %v315
      %v329 = vpack.c.b16 %v318, %v317
      %v330 = vpack.c.b16 %v320, %v319
      %v331 = vpack.c.b16 %v322, %v321
      %v332 = vpack.c.b16 %v324, %v323
      %341 = vmatprep.subr.bf16.mxu0 0
      %342 = vmatpush1.bf16.msra.mxu0 %v325
      %343 = vmatprep.subr.bf16.mxu0 0
      %344 = vmatpush1.bf16.msra.mxu0 %v326
      %345 = vmatprep.subr.bf16.mxu0 0
      %346 = vmatpush1.bf16.msra.mxu0 %v327
      %347 = vmatprep.subr.bf16.mxu0 0
      %348 = vmatpush1.bf16.msra.mxu0 %v328
      %349 = vmatprep.subr.bf16.mxu0 0
      %350 = vmatpush1.bf16.msra.mxu0 %v329
      %351 = vmatprep.subr.bf16.mxu0 0
      %352 = vmatpush1.bf16.msra.mxu0 %v330
      %353 = vmatprep.subr.bf16.mxu0 0
      %354 = vmatpush1.bf16.msra.mxu0 %v331
      %355 = vmatprep.subr.bf16.mxu0 0
      %356 = vmatpush1.bf16.msra.mxu0 %v332
      %357 = vmatprep.subr.bf16.mxu0 0
      %358 = vmatpush1.bf16.msra.mxu0 0
      %359 = vmatprep.subr.bf16.mxu0 0
      %360 = vmatpush1.bf16.msra.mxu0 0
      %361 = vmatprep.subr.bf16.mxu0 0
      %362 = vmatpush1.bf16.msra.mxu0 0
      %363 = vmatprep.subr.bf16.mxu0 0
      %364 = vmatpush1.bf16.msra.mxu0 0
      %365 = vmatprep.subr.bf16.mxu0 0
      %366 = vmatpush1.bf16.msra.mxu0 0
      %367 = vmatprep.subr.bf16.mxu0 0
      %368 = vmatpush1.bf16.msra.mxu0 0
      %369 = vmatprep.subr.bf16.mxu0 0
      %370 = vmatpush1.bf16.msra.mxu0 0
      %371 = vmatprep.subr.bf16.mxu0 0
      %372 = vmatpush1.bf16.msra.mxu0 0
      %373 = vmatprep.mubr.bf16.mxu0 0
      %374 = vmatmul.mubr.bf16.gmra.mrb[0].mxu0 %v187
      %v375 = vpop.f32.mrb[0].mxu0
      %v376 = vadd.f32 %v286, %v375
      %v377 = vpop.f32.mrb[0].mxu0
      %v378 = vpop.f32.mrb[0].mxu0
      %v379 = vadd.f32 %v289, %v378
      %v380 = vpop.f32.mrb[0].mxu0
      %381 = vdwg.mxu0
      %v382 = vld [vmem:[%s138] sm:$0xe]
      %s383 = scalar_lea.vmem %s1, 128
      %v384 = vld [vmem:[%s383] sm:$0xf]
      %v385 = vld [vmem:[%s383 + $0x4] sm:$0xf]
      %v386 = vld [vmem:[%s383 + $0x8] sm:$0xf]
      %v387 = vld [vmem:[%s383 + $0xc] sm:$0xf]
      %v388 = vld [vmem:[%s383 + $0x10] sm:$0xf]
      %v389 = vld [vmem:[%s383 + $0x14] sm:$0xf]
      %v390 = vld [vmem:[%s383 + $0x18] sm:$0xf]
      %v391 = vld [vmem:[%s383 + $0x1c] sm:$0xf]
      %v392 = vld [vmem:[%s383 + $0x20] sm:$0xf]
      %v393 = vld [vmem:[%s383 + $0x24] sm:$0xf]
      %v394 = vld [vmem:[%s383 + $0x28] sm:$0xf]
      %v395 = vld [vmem:[%s383 + $0x2c] sm:$0xf]
      %v396 = vld [vmem:[%s383 + $0x30] sm:$0xf]
      %v397 = vld [vmem:[%s383 + $0x34] sm:$0xf]
      %v398 = vld [vmem:[%s383 + $0x38] sm:$0xf]
      %v399 = vld [vmem:[%s383 + $0x3c] sm:$0xf]
      %v401 = vunpack.c.l.b16 %v382
      %v402 = vpack.c.b16 %v185, %v401
      %vm403 = vcmask 1046528
      %v404 = vrot.slane %v402, 1
      %v405 = vrot.slane %v188, 1
      %v406 = vsel %vm403, %v404, %v405
      %v424 = vunpack.c.l.b16 %v384
      %v425 = vunpack.c.l.b16 %v385
      %v426 = vunpack.c.l.b16 %v386
      %v427 = vunpack.c.l.b16 %v387
      %v428 = vunpack.c.l.b16 %v388
      %v429 = vunpack.c.l.b16 %v389
      %v430 = vunpack.c.l.b16 %v390
      %v431 = vunpack.c.l.b16 %v391
      %v432 = vunpack.c.l.b16 %v392
      %v433 = vunpack.c.l.b16 %v393
      %v434 = vunpack.c.l.b16 %v394
      %v435 = vunpack.c.l.b16 %v395
      %v436 = vunpack.c.l.b16 %v396
      %v437 = vunpack.c.l.b16 %v397
      %v438 = vunpack.c.l.b16 %v398
      %v439 = vunpack.c.l.b16 %v399
      %v440 = vpack.c.b16 %v425, %v424
      %v441 = vpack.c.b16 %v427, %v426
      %v442 = vpack.c.b16 %v429, %v428
      %v443 = vpack.c.b16 %v431, %v430
      %v444 = vpack.c.b16 %v433, %v432
      %v445 = vpack.c.b16 %v435, %v434
      %v446 = vpack.c.b16 %v437, %v436
      %v447 = vpack.c.b16 %v439, %v438
      %456 = vmatprep.subr.bf16.mxu0 0
      %457 = vmatpush1.bf16.msra.mxu0 %v440
      %458 = vmatprep.subr.bf16.mxu0 0
      %459 = vmatpush1.bf16.msra.mxu0 %v441
      %460 = vmatprep.subr.bf16.mxu0 0
      %461 = vmatpush1.bf16.msra.mxu0 %v442
      %462 = vmatprep.subr.bf16.mxu0 0
      %463 = vmatpush1.bf16.msra.mxu0 %v443
      %464 = vmatprep.subr.bf16.mxu0 0
      %465 = vmatpush1.bf16.msra.mxu0 %v444
      %466 = vmatprep.subr.bf16.mxu0 0
      %467 = vmatpush1.bf16.msra.mxu0 %v445
      %468 = vmatprep.subr.bf16.mxu0 0
      %469 = vmatpush1.bf16.msra.mxu0 %v446
      %470 = vmatprep.subr.bf16.mxu0 0
      %471 = vmatpush1.bf16.msra.mxu0 %v447
      %472 = vmatprep.subr.bf16.mxu0 0
      %473 = vmatpush1.bf16.msra.mxu0 0
      %474 = vmatprep.subr.bf16.mxu0 0
      %475 = vmatpush1.bf16.msra.mxu0 0
      %476 = vmatprep.subr.bf16.mxu0 0
      %477 = vmatpush1.bf16.msra.mxu0 0
      %478 = vmatprep.subr.bf16.mxu0 0
      %479 = vmatpush1.bf16.msra.mxu0 0
      %480 = vmatprep.subr.bf16.mxu0 0
      %481 = vmatpush1.bf16.msra.mxu0 0
      %482 = vmatprep.subr.bf16.mxu0 0
      %483 = vmatpush1.bf16.msra.mxu0 0
      %484 = vmatprep.subr.bf16.mxu0 0
      %485 = vmatpush1.bf16.msra.mxu0 0
      %486 = vmatprep.subr.bf16.mxu0 0
      %487 = vmatpush1.bf16.msra.mxu0 0
      %488 = vmatprep.mubr.bf16.mxu0 0
      %489 = vmatmul.mubr.bf16.gmra.mrb[0].mxu0 %v406
      %v490 = vpop.f32.mrb[0].mxu0
      %v491 = vadd.f32 0.0, %v490
      %v492 = vpop.f32.mrb[0].mxu0
      %v493 = vpop.f32.mrb[0].mxu0
      %v494 = vadd.f32 0.0, %v493
      %v495 = vpop.f32.mrb[0].mxu0
      %496 = vdwg.mxu0
      %v497 = vadd.f32 %v376, %v491
      %v498 = vadd.f32 %v379, %v494
      %v499 = vmax.f32 %v497, 0.0
      %v500 = vmax.f32 %v498, 0.0
      %501 = vst [vmem:[%s143] sm:$0xff] %v499
      %502 = vst [vmem:[%s143 + $0x8] sm:$0xff] %v500
      %p503 = scmp.lt.s32.totalorder %s13, 1
      %s504 = scalar_select %p503, %s13, 1
      %s505 = smul.addr %s504, 2
      %s506 = smul.addr %s505, 8
      %s507 = scalar_lea.vmem %s2, %s506
      // Predicated region
      $region29: #{_nchw_jit.1} parent=27 // pred_check
        %p508 = pneg %p78
      $region30: #{_nchw_jit.1} parent=27 // pred_check_branch
        %510 = sbr.rel (%p508) target = $region32
      $region31: #{_nchw_jit.1} parent=27 // pred_region
        _
      $region32: #{_nchw_jit.1} parent=27 // pred_fallthru
        _
    $region28: #{_nchw_jit.1} parent=5 // pred_fallthru
      _
    %p511 = scmp.le.s32.totalorder 2, %s8
    // Predicated region
    $region33: #{_nchw_jit.1} parent=5 // pred_check
      %p512 = pneg %p511
    $region34: #{_nchw_jit.1} parent=5 // pred_check_branch
      %514 = sbr.rel (%p512) target = $region36
    $region35: #{_nchw_jit.1} parent=5 // pred_region
      %s515 = ssub.s32 %s8, 2
      // Predicated region
      $region37: #{_nchw_jit.1} parent=35 // pred_check
        %p516 = pneg %p84
      $region38: #{_nchw_jit.1} parent=35 // pred_check_branch
        %518 = sbr.rel (%p516) target = $region40
      $region39: #{_nchw_jit.1} parent=35 // pred_region
        %p519 = scmp.lt.s32.totalorder %s14, 1
        %s520 = scalar_select %p519, %s14, 1
        %s521 = smul.addr %s520, 2
        %s522 = smul.addr %s521, 8
        %s523 = scalar_lea.vmem %s2, %s522
      $region40: #{_nchw_jit.1} parent=35 // pred_fallthru
        _
    $region36: #{_nchw_jit.1} parent=5 // pred_fallthru
      _
  $region6: #{_nchw_jit.1} parent=0 // loop_footer
    %s12 = sadd.s32 1, %s8
  $region7: #{_nchw_jit.1} parent=0 // loop_footer_branch
    %7 = sbr.rel target = $region3
  $region8: #{_nchw_jit.1} parent=0 // loop_exit
    _

</llo_original>
